<compile_context>
chip_gen: v5e
topology: v5e:2x2
jax: 0.10.0
libtpu: 0.0.40
codegen_flags: <defaults>
</compile_context>

<pallas_src>
import functools

import jax
import jax.numpy as jnp
from jax.experimental import pallas as pl
from jax.experimental.pallas import tpu as pltpu

EPS_PDIST = 1e-6
EPS_CERT = 1e-6
THRESH = 0.05

_VMEM_BUDGET = 20 * 1024 * 1024       # double-buffered inputs + accumulator scratch
_VMEM_LIMIT = 32 * 1024 * 1024        # <= scoped/physical VMEM on v5e, v6e and v7x


def _loss_kernel(pred_ref, targ_ref, mask_ref, cert_ref, part_ref,
                 acc_loss, acc_mask, acc_cnt,
                 *, rows_valid, tile_rows, n_inner, ragged):
    s = pl.program_id(1)          # pixel-axis megacore split ("parallel")
    i = pl.program_id(2)          # pixel-tile reduction axis ("arbitrary", innermost)

    @pl.when(i == 0)
    def _init():
        acc_loss[...] = jnp.zeros_like(acc_loss)
        acc_mask[...] = jnp.zeros_like(acc_mask)
        acc_cnt[...] = jnp.zeros_like(acc_cnt)

    # inputs arrive in their native dtype; upcast after load (bandwidth win for bf16)
    p = pred_ref[...].astype(jnp.float32)                    # (C, TR, 128)
    t = targ_ref[...].astype(jnp.float32)
    mask = mask_ref[...].astype(jnp.float32)                 # (TR, 128)
    cm = jnp.maximum(cert_ref[...].astype(jnp.float32), EPS_CERT)

    # per-pixel Euclidean distance across channels (PairwiseDistance p=2, eps on the diff)
    diff = p - t + EPS_PDIST
    loss_reg = jnp.sqrt(jnp.sum(diff * diff, axis=0))        # (TR, 128), dense vregs

    loss_map = (3.0 * jnp.log(cm) + loss_reg / (2.0 * cm * cm)) * mask
    # count via (mask*loss_reg > 0.05): equivalent to nonzero(clamp(mask*loss_reg - 0.05, 0))
    # ONLY because mask and loss_reg are nonnegative.
    hit = mask * loss_reg > THRESH

    if ragged:
        # trailing / duplicated tiles read undefined data — select it to zero so NaN/inf
        # cannot leak through the mask==0 multiplication.
        row0 = (s * n_inner + i) * tile_rows
        local = jax.lax.broadcasted_iota(jnp.int32, (tile_rows, 128), 0)
        valid = (row0 + local) < rows_valid
        mask = jnp.where(valid, mask, 0.0)
        loss_map = jnp.where(valid, loss_map, 0.0)
        hit = jnp.logical_and(valid, hit)

    # lane-parallel accumulation — per-step VPU adds only, no cross-lane reductions
    acc_loss[...] += loss_map
    acc_mask[...] += mask
    acc_cnt[...] += hit.astype(jnp.float32)

    @pl.when(i == n_inner - 1)
    def _finalize():
        # one sublane reduction per (batch, split), once at the end
        part_ref[0:1, :] = jnp.sum(acc_loss[...], axis=0, keepdims=True)
        part_ref[1:2, :] = jnp.sum(acc_mask[...], axis=0, keepdims=True)
        part_ref[2:3, :] = jnp.sum(acc_cnt[...], axis=0, keepdims=True)


def _choose_tile_rows(R, C, in_itemsize, ms_itemsize, tile_rows):
    """Largest rows-per-tile (128 pixels per row) whose working set fits the VMEM budget."""
    bytes_per_row = 2 * C * 128 * in_itemsize + 2 * 128 * ms_itemsize   # pred+target+mask+cert
    denom = 2 * bytes_per_row + 3 * 128 * 4                             # double-buffer + f32 scratch
    tr = max(8, _VMEM_BUDGET // denom)
    tr = min(tr, tile_rows)
    if tr >= R:
        return R                      # single full-extent block (exempt from (8,128) divisibility)
    if tr >= 32:
        return (tr // 32) * 32        # multiple of 32 keeps sublane tiling valid for any dtype
    return max((tr // 8) * 8, 8)


def euclidean_loss_with_uncertainty(pred, target, mask, certainty, *, tile_rows=1024):
    """pred/target: (B,C,H,W) float (NCHW). mask/certainty: (B,H,W) float. Returns (loss, accuracy)."""
    B, C, H, W = pred.shape
    HW = H * W

    # free reshapes only — no transpose, no wrapper dtype cast, no extra HBM round trip
    pred_r = pred.reshape(B, C, HW)
    targ_r = target.reshape(B, C, HW)
    mask_r = mask.reshape(B, HW)
    cert_r = certainty.reshape(B, HW)

    R = -(-HW // 128)                 # cdiv(HW, 128)
    hw_pad = R * 128
    if hw_pad != HW:
        # TODO(synk): lane-pad costs one extra HBM pass over pred/target; only hit when
        # H*W is not a multiple of 128 (uncommon for vision feature maps).
        pad = hw_pad - HW
        pred_r = jnp.pad(pred_r, ((0, 0), (0, 0), (0, pad)))
        targ_r = jnp.pad(targ_r, ((0, 0), (0, 0), (0, pad)))
        mask_r = jnp.pad(mask_r, ((0, 0), (0, pad)))     # mask == 0 on padding -> no contribution
        cert_r = jnp.pad(cert_r, ((0, 0), (0, pad)))     # clamped to 1e-6 in-kernel, masked anyway

    pred_r = pred_r.reshape(B, C, R, 128)
    targ_r = targ_r.reshape(B, C, R, 128)
    mask_r = mask_r.reshape(B, R, 128)
    cert_r = cert_r.reshape(B, R, 128)

    in_isz = max(jnp.dtype(pred.dtype).itemsize, jnp.dtype(target.dtype).itemsize)
    ms_isz = max(jnp.dtype(mask.dtype).itemsize, jnp.dtype(certainty.dtype).itemsize)
    tr = _choose_tile_rows(R, C, in_isz, ms_isz, tile_rows)

    nb = -(-R // tr)                  # number of row blocks
    split = 2 if nb >= 2 else 1       # size-2 pixel-axis split for v7x megacore; no-op otherwise
    ni = -(-nb // split)              # inner (reduction) steps per split
    ragged = (split * ni * tr) != R   # any step containing undefined / duplicated rows?
    last_blk = nb - 1

    def row_blk(s, i):
        # clamp so an overflow/duplicate step never starts an out-of-bounds DMA;
        # its contribution is zeroed in-kernel by the validity select.
        return jnp.minimum(s * ni + i, last_blk)

    kernel = functools.partial(_loss_kernel, rows_valid=R, tile_rows=tr,
                               n_inner=ni, ragged=ragged)

    partials = pl.pallas_call(
        kernel,
        out_shape=jax.ShapeDtypeStruct((B, split, 3, 128), jnp.float32),
        grid_spec=pltpu.PrefetchScalarGridSpec(
            num_scalar_prefetch=0,
            grid=(B, split, ni),
            in_specs=[
                pl.BlockSpec((None, C, tr, 128), lambda b, s, i: (b, 0, row_blk(s, i), 0)),
                pl.BlockSpec((None, C, tr, 128), lambda b, s, i: (b, 0, row_blk(s, i), 0)),
                pl.BlockSpec((None, tr, 128), lambda b, s, i: (b, row_blk(s, i), 0)),
                pl.BlockSpec((None, tr, 128), lambda b, s, i: (b, row_blk(s, i), 0)),
            ],
            out_specs=pl.BlockSpec((None, None, 3, 128), lambda b, s, i: (b, s, 0, 0)),
            scratch_shapes=[
                pltpu.VMEM((tr, 128), jnp.float32),   # running sum(loss_map)
                pltpu.VMEM((tr, 128), jnp.float32),   # running sum(mask)
                pltpu.VMEM((tr, 128), jnp.float32),   # running count(mask*loss_reg > 0.05)
            ],
        ),
        compiler_params=pltpu.CompilerParams(
            dimension_semantics=("parallel", "parallel", "arbitrary"),
            vmem_limit_bytes=_VMEM_LIMIT),
    )(pred_r, targ_r, mask_r, cert_r)

    # tiny epilogue combine in plain JAX (B*split*3*128 floats)
    sums = jnp.sum(partials, axis=(0, 1, 3))          # (3,)
    sum_loss, sum_mask, cnt = sums[0], sums[1], sums[2]
    loss = sum_loss / sum_mask                        # NaN/inf if mask all-zero (matches PyTorch)
    valid = sum_mask + 1.0
    accuracy = (valid - cnt) / valid
    return loss, accuracy


def _reference(pred, target, mask, certainty):
    # pure-JAX mirror of the PyTorch forward, for a sanity check
    diff = jnp.transpose(pred, (0, 2, 3, 1)) - jnp.transpose(target, (0, 2, 3, 1)) + EPS_PDIST
    loss_reg = jnp.sqrt(jnp.sum(diff * diff, axis=-1))              # (B,H,W)
    cm = jnp.maximum(certainty, EPS_CERT)
    loss_map = (3.0 * jnp.log(cm) + loss_reg / (2.0 * cm * cm)) * mask
    loss = jnp.sum(loss_map) / jnp.sum(mask)
    valid = jnp.sum(mask) + 1.0
    thres = jnp.maximum(mask * loss_reg - THRESH, 0.0)
    num_acc = valid - jnp.sum(thres != 0.0)
    return loss, num_acc / valid


if __name__ == "__main__":
    key = jax.random.PRNGKey(0)
    k1, k2, k3, k4 = jax.random.split(key, 4)

    B, C, H, W = 2, 4, 16, 16   # small shapes; HW = 256 per batch row

    pred = jax.random.normal(k1, (B, C, H, W), dtype=jnp.float32)
    target = jax.random.normal(k2, (B, C, H, W), dtype=jnp.float32)
    # binary-ish mask with some zeros; certainty strictly positive-ish
    mask = (jax.random.uniform(k3, (B, H, W)) > 0.3).astype(jnp.float32)
    certainty = jax.random.uniform(k4, (B, H, W), minval=0.05, maxval=2.0).astype(jnp.float32)

    loss, acc = euclidean_loss_with_uncertainty(pred, target, mask, certainty)
    jax.block_until_ready((loss, acc))

    ref_loss, ref_acc = _reference(pred, target, mask, certainty)
    assert jnp.allclose(loss, ref_loss, rtol=1e-4, atol=1e-4), (loss, ref_loss)
    assert jnp.allclose(acc, ref_acc, rtol=1e-4, atol=1e-4), (acc, ref_acc)

    print("KERNEL_OK")
</pallas_src>

<mosaic_0001>
module attributes {stable_mosaic.version = 11 : i64} {
  func.func @_loss_kernel(%arg0: i32, %arg1: i32, %arg2: i32, %arg3: memref<1x4x2x128xf32, #tpu.memory_space<vmem>>, %arg4: memref<1x4x2x128xf32, #tpu.memory_space<vmem>>, %arg5: memref<1x2x128xf32, #tpu.memory_space<vmem>>, %arg6: memref<1x2x128xf32, #tpu.memory_space<vmem>>, %arg7: memref<1x1x3x128xf32, #tpu.memory_space<vmem>>, %arg8: memref<2x128xf32, #tpu.memory_space<vmem>>, %arg9: memref<2x128xf32, #tpu.memory_space<vmem>>, %arg10: memref<2x128xf32, #tpu.memory_space<vmem>>) attributes {dimension_semantics = [#tpu.dimension_semantics<parallel>, #tpu.dimension_semantics<parallel>, #tpu.dimension_semantics<arbitrary>], iteration_bounds = array<i64: 2, 1, 1>, scalar_prefetch = 0 : i64, scratch_operands = 3 : i64, tpu.core_type = #tpu.core_type<tc>, window_params = [{transform_indices = @transform_0, window_bounds = array<i64: 1, 4, 2, 128>}, {transform_indices = @transform_1, window_bounds = array<i64: 1, 4, 2, 128>}, {transform_indices = @transform_2, window_bounds = array<i64: 1, 2, 128>}, {transform_indices = @transform_3, window_bounds = array<i64: 1, 2, 128>}, {transform_indices = @transform_4, window_bounds = array<i64: 1, 1, 3, 128>}]} {
    %c0_i32 = arith.constant 0 : i32
    %0 = arith.cmpi eq, %arg2, %c0_i32 : i32
    %1 = arith.extui %0 : i1 to i32
    %c0_i32_0 = arith.constant 0 : i32
    %2 = arith.cmpi ne, %1, %c0_i32_0 : i32
    scf.if %2 {
      %cst_33 = arith.constant 0.000000e+00 : f32
      %45 = vector.broadcast %cst_33 : f32 to vector<2x128xf32>
      %c0_34 = arith.constant 0 : index
      %c0_35 = arith.constant 0 : index
      %46 = vector.load %arg8[%c0_34, %c0_35] : memref<2x128xf32, #tpu.memory_space<vmem>>, vector<2x128xf32>
      tpu.vector_store %arg8[%c0_34, %c0_35], %45 {strides = array<i32>} : memref<2x128xf32, #tpu.memory_space<vmem>>, vector<2x128xf32>,
      %cst_36 = arith.constant 0.000000e+00 : f32
      %47 = vector.broadcast %cst_36 : f32 to vector<2x128xf32>
      %c0_37 = arith.constant 0 : index
      %c0_38 = arith.constant 0 : index
      %48 = vector.load %arg9[%c0_37, %c0_38] : memref<2x128xf32, #tpu.memory_space<vmem>>, vector<2x128xf32>
      tpu.vector_store %arg9[%c0_37, %c0_38], %47 {strides = array<i32>} : memref<2x128xf32, #tpu.memory_space<vmem>>, vector<2x128xf32>,
      %cst_39 = arith.constant 0.000000e+00 : f32
      %49 = vector.broadcast %cst_39 : f32 to vector<2x128xf32>
      %c0_40 = arith.constant 0 : index
      %c0_41 = arith.constant 0 : index
      %50 = vector.load %arg10[%c0_40, %c0_41] : memref<2x128xf32, #tpu.memory_space<vmem>>, vector<2x128xf32>
      tpu.vector_store %arg10[%c0_40, %c0_41], %49 {strides = array<i32>} : memref<2x128xf32, #tpu.memory_space<vmem>>, vector<2x128xf32>,
    } else {
    }
    %c0 = arith.constant 0 : index
    %c0_1 = arith.constant 0 : index
    %c0_2 = arith.constant 0 : index
    %c0_3 = arith.constant 0 : index
    %3 = vector.load %arg3[%c0, %c0_1, %c0_2, %c0_3] : memref<1x4x2x128xf32, #tpu.memory_space<vmem>>, vector<1x4x2x128xf32>
    %4 = vector.shape_cast %3 : vector<1x4x2x128xf32> to vector<4x2x128xf32>
    %c0_4 = arith.constant 0 : index
    %c0_5 = arith.constant 0 : index
    %c0_6 = arith.constant 0 : index
    %c0_7 = arith.constant 0 : index
    %5 = vector.load %arg4[%c0_4, %c0_5, %c0_6, %c0_7] : memref<1x4x2x128xf32, #tpu.memory_space<vmem>>, vector<1x4x2x128xf32>
    %6 = vector.shape_cast %5 : vector<1x4x2x128xf32> to vector<4x2x128xf32>
    %c0_8 = arith.constant 0 : index
    %c0_9 = arith.constant 0 : index
    %c0_10 = arith.constant 0 : index
    %7 = vector.load %arg5[%c0_8, %c0_9, %c0_10] : memref<1x2x128xf32, #tpu.memory_space<vmem>>, vector<1x2x128xf32>
    %8 = vector.shape_cast %7 : vector<1x2x128xf32> to vector<2x128xf32>
    %c0_11 = arith.constant 0 : index
    %c0_12 = arith.constant 0 : index
    %c0_13 = arith.constant 0 : index
    %9 = vector.load %arg6[%c0_11, %c0_12, %c0_13] : memref<1x2x128xf32, #tpu.memory_space<vmem>>, vector<1x2x128xf32>
    %10 = vector.shape_cast %9 : vector<1x2x128xf32> to vector<2x128xf32>
    %cst = arith.constant 9.99999997E-7 : f32
    %11 = vector.broadcast %cst : f32 to vector<2x128xf32>
    %12 = arith.maximumf %10, %11 : vector<2x128xf32>
    %13 = arith.subf %4, %6 : vector<4x2x128xf32>
    %cst_14 = arith.constant 9.99999997E-7 : f32
    %14 = vector.broadcast %cst_14 : f32 to vector<4x2x128xf32>
    %15 = arith.addf %13, %14 : vector<4x2x128xf32>
    %16 = arith.mulf %15, %15 : vector<4x2x128xf32>
    %cst_15 = arith.constant dense<0.000000e+00> : vector<2x128xf32>
    %17 = vector.multi_reduction <add>, %16, %cst_15 [0] : vector<4x2x128xf32> to vector<2x128xf32>
    %18 = math.sqrt %17 : vector<2x128xf32>
    %19 = math.log %12 : vector<2x128xf32>
    %cst_16 = arith.constant 3.000000e+00 : f32
    %20 = vector.broadcast %cst_16 : f32 to vector<2x128xf32>
    %21 = arith.mulf %20, %19 : vector<2x128xf32>
    %cst_17 = arith.constant 2.000000e+00 : f32
    %22 = vector.broadcast %cst_17 : f32 to vector<2x128xf32>
    %23 = arith.mulf %22, %12 : vector<2x128xf32>
    %24 = arith.mulf %23, %12 : vector<2x128xf32>
    %25 = arith.divf %18, %24 : vector<2x128xf32>
    %26 = arith.addf %21, %25 : vector<2x128xf32>
    %27 = arith.mulf %26, %8 : vector<2x128xf32>
    %28 = arith.mulf %8, %18 : vector<2x128xf32>
    %cst_18 = arith.constant 5.000000e-02 : f32
    %29 = vector.broadcast %cst_18 : f32 to vector<2x128xf32>
    %30 = arith.cmpf ogt, %28, %29 : vector<2x128xf32>
    %c0_19 = arith.constant 0 : index
    %c0_20 = arith.constant 0 : index
    %31 = vector.load %arg8[%c0_19, %c0_20] : memref<2x128xf32, #tpu.memory_space<vmem>>, vector<2x128xf32>
    %32 = arith.addf %31, %27 : vector<2x128xf32>
    %c0_21 = arith.constant 0 : index
    %c0_22 = arith.constant 0 : index
    %33 = vector.load %arg8[%c0_21, %c0_22] : memref<2x128xf32, #tpu.memory_space<vmem>>, vector<2x128xf32>
    tpu.vector_store %arg8[%c0_21, %c0_22], %32 {strides = array<i32>} : memref<2x128xf32, #tpu.memory_space<vmem>>, vector<2x128xf32>,
    %c0_23 = arith.constant 0 : index
    %c0_24 = arith.constant 0 : index
    %34 = vector.load %arg9[%c0_23, %c0_24] : memref<2x128xf32, #tpu.memory_space<vmem>>, vector<2x128xf32>
    %35 = arith.addf %34, %8 : vector<2x128xf32>
    %c0_25 = arith.constant 0 : index
    %c0_26 = arith.constant 0 : index
    %36 = vector.load %arg9[%c0_25, %c0_26] : memref<2x128xf32, #tpu.memory_space<vmem>>, vector<2x128xf32>
    tpu.vector_store %arg9[%c0_25, %c0_26], %35 {strides = array<i32>} : memref<2x128xf32, #tpu.memory_space<vmem>>, vector<2x128xf32>,
    %c0_27 = arith.constant 0 : index
    %c0_28 = arith.constant 0 : index
    %37 = vector.load %arg10[%c0_27, %c0_28] : memref<2x128xf32, #tpu.memory_space<vmem>>, vector<2x128xf32>
    %38 = arith.extui %30 : vector<2x128xi1> to vector<2x128xi32>
    %39 = arith.sitofp %38 : vector<2x128xi32> to vector<2x128xf32>
    %40 = arith.addf %37, %39 : vector<2x128xf32>
    %c0_29 = arith.constant 0 : index
    %c0_30 = arith.constant 0 : index
    %41 = vector.load %arg10[%c0_29, %c0_30] : memref<2x128xf32, #tpu.memory_space<vmem>>, vector<2x128xf32>
    tpu.vector_store %arg10[%c0_29, %c0_30], %40 {strides = array<i32>} : memref<2x128xf32, #tpu.memory_space<vmem>>, vector<2x128xf32>,
    %c0_i32_31 = arith.constant 0 : i32
    %42 = arith.cmpi eq, %arg2, %c0_i32_31 : i32
    %43 = arith.extui %42 : i1 to i32
    %c0_i32_32 = arith.constant 0 : i32
    %44 = arith.cmpi ne, %43, %c0_i32_32 : i32
    scf.if %44 {
      %c0_33 = arith.constant 0 : index
      %c0_34 = arith.constant 0 : index
      %45 = vector.load %arg8[%c0_33, %c0_34] : memref<2x128xf32, #tpu.memory_space<vmem>>, vector<2x128xf32>
      %cst_35 = arith.constant dense<0.000000e+00> : vector<128xf32>
      %46 = vector.multi_reduction <add>, %45, %cst_35 [0] : vector<2x128xf32> to vector<128xf32>
      %47 = vector.shape_cast %46 : vector<128xf32> to vector<1x128xf32>
      %c0_36 = arith.constant 0 : index
      %c0_37 = arith.constant 0 : index
      %c0_38 = arith.constant 0 : index
      %c0_39 = arith.constant 0 : index
      %48 = vector.load %arg7[%c0_36, %c0_37, %c0_38, %c0_39] : memref<1x1x3x128xf32, #tpu.memory_space<vmem>>, vector<1x1x1x128xf32>
      %49 = vector.shape_cast %48 : vector<1x1x1x128xf32> to vector<1x128xf32>
      %50 = vector.shape_cast %47 : vector<1x128xf32> to vector<1x1x1x128xf32>
      tpu.vector_store %arg7[%c0_36, %c0_37, %c0_38, %c0_39], %50 {strides = array<i32>} : memref<1x1x3x128xf32, #tpu.memory_space<vmem>>, vector<1x1x1x128xf32>,
      %c0_40 = arith.constant 0 : index
      %c0_41 = arith.constant 0 : index
      %51 = vector.load %arg9[%c0_40, %c0_41] : memref<2x128xf32, #tpu.memory_space<vmem>>, vector<2x128xf32>
      %cst_42 = arith.constant dense<0.000000e+00> : vector<128xf32>
      %52 = vector.multi_reduction <add>, %51, %cst_42 [0] : vector<2x128xf32> to vector<128xf32>
      %53 = vector.shape_cast %52 : vector<128xf32> to vector<1x128xf32>
      %c0_43 = arith.constant 0 : index
      %c0_44 = arith.constant 0 : index
      %c1 = arith.constant 1 : index
      %c0_45 = arith.constant 0 : index
      %54 = vector.load %arg7[%c0_43, %c0_44, %c1, %c0_45] : memref<1x1x3x128xf32, #tpu.memory_space<vmem>>, vector<1x1x1x128xf32>
      %55 = vector.shape_cast %54 : vector<1x1x1x128xf32> to vector<1x128xf32>
      %56 = vector.shape_cast %53 : vector<1x128xf32> to vector<1x1x1x128xf32>
      tpu.vector_store %arg7[%c0_43, %c0_44, %c1, %c0_45], %56 {strides = array<i32>} : memref<1x1x3x128xf32, #tpu.memory_space<vmem>>, vector<1x1x1x128xf32>,
      %c0_46 = arith.constant 0 : index
      %c0_47 = arith.constant 0 : index
      %57 = vector.load %arg10[%c0_46, %c0_47] : memref<2x128xf32, #tpu.memory_space<vmem>>, vector<2x128xf32>
      %cst_48 = arith.constant dense<0.000000e+00> : vector<128xf32>
      %58 = vector.multi_reduction <add>, %57, %cst_48 [0] : vector<2x128xf32> to vector<128xf32>
      %59 = vector.shape_cast %58 : vector<128xf32> to vector<1x128xf32>
      %c0_49 = arith.constant 0 : index
      %c0_50 = arith.constant 0 : index
      %c2 = arith.constant 2 : index
      %c0_51 = arith.constant 0 : index
      %60 = vector.load %arg7[%c0_49, %c0_50, %c2, %c0_51] : memref<1x1x3x128xf32, #tpu.memory_space<vmem>>, vector<1x1x1x128xf32>
      %61 = vector.shape_cast %60 : vector<1x1x1x128xf32> to vector<1x128xf32>
      %62 = vector.shape_cast %59 : vector<1x128xf32> to vector<1x1x1x128xf32>
      tpu.vector_store %arg7[%c0_49, %c0_50, %c2, %c0_51], %62 {strides = array<i32>} : memref<1x1x3x128xf32, #tpu.memory_space<vmem>>, vector<1x1x1x128xf32>,
    } else {
    }
    return
  }
  func.func @transform_0(%arg0: i32, %arg1: i32, %arg2: i32) -> (i32, i32, i32, i32) {
    %c1_i32 = arith.constant 1 : i32
    %0 = arith.muli %arg1, %c1_i32 : i32
    %1 = arith.addi %0, %arg2 : i32
    %c0_i32 = arith.constant 0 : i32
    %2 = arith.minsi %1, %c0_i32 : i32
    %c0_i32_0 = arith.constant 0 : i32
    %c0_i32_1 = arith.constant 0 : i32
    %c0_i32_2 = arith.constant 0 : i32
    return %arg0, %c0_i32_0, %2, %c0_i32_1 : i32, i32, i32, i32
  }
  func.func @transform_1(%arg0: i32, %arg1: i32, %arg2: i32) -> (i32, i32, i32, i32) {
    %c1_i32 = arith.constant 1 : i32
    %0 = arith.muli %arg1, %c1_i32 : i32
    %1 = arith.addi %0, %arg2 : i32
    %c0_i32 = arith.constant 0 : i32
    %2 = arith.minsi %1, %c0_i32 : i32
    %c0_i32_0 = arith.constant 0 : i32
    %c0_i32_1 = arith.constant 0 : i32
    %c0_i32_2 = arith.constant 0 : i32
    return %arg0, %c0_i32_0, %2, %c0_i32_1 : i32, i32, i32, i32
  }
  func.func @transform_2(%arg0: i32, %arg1: i32, %arg2: i32) -> (i32, i32, i32) {
    %c1_i32 = arith.constant 1 : i32
    %0 = arith.muli %arg1, %c1_i32 : i32
    %1 = arith.addi %0, %arg2 : i32
    %c0_i32 = arith.constant 0 : i32
    %2 = arith.minsi %1, %c0_i32 : i32
    %c0_i32_0 = arith.constant 0 : i32
    %c0_i32_1 = arith.constant 0 : i32
    return %arg0, %2, %c0_i32_0 : i32, i32, i32
  }
  func.func @transform_3(%arg0: i32, %arg1: i32, %arg2: i32) -> (i32, i32, i32) {
    %c1_i32 = arith.constant 1 : i32
    %0 = arith.muli %arg1, %c1_i32 : i32
    %1 = arith.addi %0, %arg2 : i32
    %c0_i32 = arith.constant 0 : i32
    %2 = arith.minsi %1, %c0_i32 : i32
    %c0_i32_0 = arith.constant 0 : i32
    %c0_i32_1 = arith.constant 0 : i32
    return %arg0, %2, %c0_i32_0 : i32, i32, i32
  }
  func.func @transform_4(%arg0: i32, %arg1: i32, %arg2: i32) -> (i32, i32, i32, i32) {
    %c0_i32 = arith.constant 0 : i32
    %c0_i32_0 = arith.constant 0 : i32
    %c0_i32_1 = arith.constant 0 : i32
    return %arg0, %arg1, %c0_i32, %c0_i32_0 : i32, i32, i32, i32
  }
}

</mosaic_0001>

<llo_original>
// kernel: tpu_custom_call.1
$region0: #{tpu_custom_call.1}
  #allocation0 [shape = 'u32[]', space=smem, size = 0x4, offset = 0x4, fixed_abs, tag = 'smem constant byte address 0x4 - core index']
  #allocation1 [shape = 'u32[72,128]{1,0:T(1,128)}', space=vmem, size = 0x9000, scoped, tag = 'internal scratch']
  #allocation2 [shape = 'f32[2,128]{1,0:T(2,128)}', space=vmem, size = 0x400, scoped, tag = 'scratch operand']
  #allocation3 [shape = 'f32[2,128]{1,0:T(2,128)}', space=vmem, size = 0x400, scoped, tag = 'scratch operand']
  #allocation4 [shape = 'f32[2,128]{1,0:T(2,128)}', space=vmem, size = 0x400, scoped, tag = 'scratch operand']
  %s0 = inlined_call_operand.hbm [shape: f32[2,4,2,128], index: 0, kind: input, shape index: {}]
  %s1 = inlined_call_operand.hbm [shape: f32[2,4,2,128], index: 1, kind: input, shape index: {}]
  %s2 = inlined_call_operand.hbm [shape: f32[2,2,128], index: 2, kind: input, shape index: {}]
  %s3 = inlined_call_operand.hbm [shape: f32[2,2,128], index: 3, kind: input, shape index: {}]
  %s4 = inlined_call_operand.vmem [shape: f32[2,1,3,128], index: 4, kind: output, shape index: {}]
  %s5 = sld [smem:[#allocation0]]
  $region73: #{tpu_custom_call.1} parent=0
    _
  %s7 = ssub.s32 1, %s5
  %s8 = scalar_select 0, %s7, %s5
  $region1: #{tpu_custom_call.1} parent=0
    #allocation5 [shape = 'u8[8192]{0}', space=vmem, size = 0x2000, scoped, tag = 'input window, operand 0']
    #allocation6 [shape = 's32[2]{0}', space=sflag, size = 0x8, scoped, tag = 'scoped memory for tpu_custom_call.1']
    #allocation7 [shape = 'u8[8192]{0}', space=vmem, size = 0x2000, scoped, tag = 'input window, operand 1']
    #allocation8 [shape = 's32[2]{0}', space=sflag, size = 0x8, scoped, tag = 'scoped memory for tpu_custom_call.1']
    #allocation9 [shape = 'u8[2048]{0}', space=vmem, size = 0x800, scoped, tag = 'input window, operand 2']
    #allocation10 [shape = 'u8[2048]{0}', space=vmem, size = 0x800, scoped, tag = 'input window, operand 3']
    #allocation11 [shape = 's32[2]{0}', space=sflag, size = 0x8, scoped, tag = 'scoped memory for tpu_custom_call.1']
    %9 = vsyncpa [#allocation6], 0
    %s10 = scalar_lea.sflag [#allocation6], 1
    %11 = vsyncpa %s10, 0
    %12 = vsyncpa [#allocation8], 0
    %s13 = scalar_lea.sflag [#allocation8], 1
    %14 = vsyncpa %s13, 0
    %15 = vsyncpa [#allocation11], 0
    %s16 = scalar_lea.sflag [#allocation11], 1
    %17 = vsyncpa %s16, 0
    loop: start=0, step=1, limit=4
    $region2: #{tpu_custom_call.1} parent=1 // loop_pre_header
      _
    $region3: #{tpu_custom_call.1} parent=1 // loop_header
      %s19 = sphi 0, %s23
      %p20 = scmp.ge.s32.totalorder %s19, 4
      %s26 = sphi 0, %s45
      %s27 = sphi 0, %s41
      %s28 = sphi 0, %s37
      %s29 = sphi 0, %s26
      %s30 = sphi 0, %s27
      %s31 = sphi 0, %s28
      %s32 = sphi 0, %s29
      %s33 = sphi 0, %s30
      %s34 = sphi 0, %s31
      %s56 = sphi 0, %s58
      %s59 = sphi 0, %s56
      %s60 = sphi 0, %s59
      %s76 = sphi 0, %s60
      %s90 = sphi 0, %s92
      %s93 = sphi 0, %s90
      %s94 = sphi 0, %s93
      %s110 = sphi 0, %s94
      %s124 = sphi 0, %s126
      %s127 = sphi 0, %s124
      %s128 = sphi 0, %s127
      %s144 = sphi 0, %s128
      %s158 = sphi 0, %s160
      %s161 = sphi 0, %s158
      %s162 = sphi 0, %s161
      %s178 = sphi 0, %s162
      %s186 = sphi 0, %s188
      %s189 = sphi 0, %s186
      %s190 = sphi 0, %s189
      %s206 = sphi 0, %s190
    $region4: #{tpu_custom_call.1} parent=1 // loop_header_branch
      %22 = sbr.rel (%p20) target = $region8
    $region5: #{tpu_custom_call.1} parent=1 // loop_body
      %s24 = ssub.s32 %s19, 1
      %s25 = ssub.s32 %s19, 2
      %s35 = sadd.s32 1, %s28
      %p36 = scmp.ge.s32.totalorder %s35, 1
      %s37 = scalar_select %p36, 0, %s35
      %s38 = sadd.s32 1, %s27
      %s39 = scalar_select %p36, %s38, %s27
      %p40 = scmp.ge.s32.totalorder %s39, 1
      %s41 = scalar_select %p40, 0, %s39
      %s42 = sadd.s32 1, %s26
      %s43 = scalar_select %p40, %s42, %s26
      %p44 = scmp.ge.s32.totalorder %s43, 2
      %s45 = scalar_select %p44, 0, %s43
      %s46 = sadd.s32 %s27, %s28
      %p47 = scmp.lt.s32.totalorder %s46, 0
      %s48 = scalar_select %p47, %s46, 0
      %s49 = sadd.s32 %s41, %s37
      %p50 = scmp.lt.s32.totalorder %s49, 0
      %s51 = scalar_select %p50, %s49, 0
      %s52 = ssub.s32 %s26, %s45
      %s53 = ssub.s32 %s48, %s51
      %s54 = sor.u32 %s52, %s53
      %p55 = scmp.eq.s32.totalorder %s54, 0
      %s57 = sadd.s32 %s56, 1
      %s58 = scalar_select %p55, %s56, %s57
      %p61 = pneg %p55
      %p62 = scmp.eq.s32.totalorder %s19, 1
      %p63 = por %p61, %p62
      %p64 = scmp.ne.s32.totalorder %s56, %s59
      %p65 = scmp.eq.s32.totalorder %s19, 0
      %p66 = por %p64, %p65
      %p67 = scmp.ne.s32.totalorder %s56, %s59
      %p68 = scmp.eq.s32.totalorder %s24, 1
      %p69 = por %p67, %p68
      %p70 = scmp.ne.s32.totalorder %s59, %s60
      %p71 = scmp.eq.s32.totalorder %s24, 0
      %p72 = por %p70, %p71
      %p73 = scmp.ne.s32.totalorder %s59, %s60
      %p74 = scmp.eq.s32.totalorder %s25, 1
      %p75 = por %p73, %p74
      %p77 = scmp.ne.s32.totalorder %s60, %s76
      %p78 = scmp.eq.s32.totalorder %s25, 0
      %p79 = por %p77, %p78
      %s80 = sadd.s32 %s27, %s28
      %p81 = scmp.lt.s32.totalorder %s80, 0
      %s82 = scalar_select %p81, %s80, 0
      %s83 = sadd.s32 %s41, %s37
      %p84 = scmp.lt.s32.totalorder %s83, 0
      %s85 = scalar_select %p84, %s83, 0
      %s86 = ssub.s32 %s26, %s45
      %s87 = ssub.s32 %s82, %s85
      %s88 = sor.u32 %s86, %s87
      %p89 = scmp.eq.s32.totalorder %s88, 0
      %s91 = sadd.s32 %s90, 1
      %s92 = scalar_select %p89, %s90, %s91
      %p95 = pneg %p89
      %p96 = scmp.eq.s32.totalorder %s19, 1
      %p97 = por %p95, %p96
      %p98 = scmp.ne.s32.totalorder %s90, %s93
      %p99 = scmp.eq.s32.totalorder %s19, 0
      %p100 = por %p98, %p99
      %p101 = scmp.ne.s32.totalorder %s90, %s93
      %p102 = scmp.eq.s32.totalorder %s24, 1
      %p103 = por %p101, %p102
      %p104 = scmp.ne.s32.totalorder %s93, %s94
      %p105 = scmp.eq.s32.totalorder %s24, 0
      %p106 = por %p104, %p105
      %p107 = scmp.ne.s32.totalorder %s93, %s94
      %p108 = scmp.eq.s32.totalorder %s25, 1
      %p109 = por %p107, %p108
      %p111 = scmp.ne.s32.totalorder %s94, %s110
      %p112 = scmp.eq.s32.totalorder %s25, 0
      %p113 = por %p111, %p112
      %s114 = sadd.s32 %s27, %s28
      %p115 = scmp.lt.s32.totalorder %s114, 0
      %s116 = scalar_select %p115, %s114, 0
      %s117 = sadd.s32 %s41, %s37
      %p118 = scmp.lt.s32.totalorder %s117, 0
      %s119 = scalar_select %p118, %s117, 0
      %s120 = ssub.s32 %s26, %s45
      %s121 = ssub.s32 %s116, %s119
      %s122 = sor.u32 %s120, %s121
      %p123 = scmp.eq.s32.totalorder %s122, 0
      %s125 = sadd.s32 %s124, 1
      %s126 = scalar_select %p123, %s124, %s125
      %p129 = pneg %p123
      %p130 = scmp.eq.s32.totalorder %s19, 1
      %p131 = por %p129, %p130
      %p132 = scmp.ne.s32.totalorder %s124, %s127
      %p133 = scmp.eq.s32.totalorder %s19, 0
      %p134 = por %p132, %p133
      %p135 = scmp.ne.s32.totalorder %s124, %s127
      %p136 = scmp.eq.s32.totalorder %s24, 1
      %p137 = por %p135, %p136
      %p138 = scmp.ne.s32.totalorder %s127, %s128
      %p139 = scmp.eq.s32.totalorder %s24, 0
      %p140 = por %p138, %p139
      %p141 = scmp.ne.s32.totalorder %s127, %s128
      %p142 = scmp.eq.s32.totalorder %s25, 1
      %p143 = por %p141, %p142
      %p145 = scmp.ne.s32.totalorder %s128, %s144
      %p146 = scmp.eq.s32.totalorder %s25, 0
      %p147 = por %p145, %p146
      %s148 = sadd.s32 %s27, %s28
      %p149 = scmp.lt.s32.totalorder %s148, 0
      %s150 = scalar_select %p149, %s148, 0
      %s151 = sadd.s32 %s41, %s37
      %p152 = scmp.lt.s32.totalorder %s151, 0
      %s153 = scalar_select %p152, %s151, 0
      %s154 = ssub.s32 %s26, %s45
      %s155 = ssub.s32 %s150, %s153
      %s156 = sor.u32 %s154, %s155
      %p157 = scmp.eq.s32.totalorder %s156, 0
      %s159 = sadd.s32 %s158, 1
      %s160 = scalar_select %p157, %s158, %s159
      %p163 = pneg %p157
      %p164 = scmp.eq.s32.totalorder %s19, 1
      %p165 = por %p163, %p164
      %p166 = scmp.ne.s32.totalorder %s158, %s161
      %p167 = scmp.eq.s32.totalorder %s19, 0
      %p168 = por %p166, %p167
      %p169 = scmp.ne.s32.totalorder %s158, %s161
      %p170 = scmp.eq.s32.totalorder %s24, 1
      %p171 = por %p169, %p170
      %p172 = scmp.ne.s32.totalorder %s161, %s162
      %p173 = scmp.eq.s32.totalorder %s24, 0
      %p174 = por %p172, %p173
      %p175 = scmp.ne.s32.totalorder %s161, %s162
      %p176 = scmp.eq.s32.totalorder %s25, 1
      %p177 = por %p175, %p176
      %p179 = scmp.ne.s32.totalorder %s162, %s178
      %p180 = scmp.eq.s32.totalorder %s25, 0
      %p181 = por %p179, %p180
      %s182 = ssub.s32 %s26, %s45
      %s183 = ssub.s32 %s27, %s41
      %s184 = sor.u32 %s182, %s183
      %p185 = scmp.eq.s32.totalorder %s184, 0
      %s187 = sadd.s32 %s186, 1
      %s188 = scalar_select %p185, %s186, %s187
      %p191 = pneg %p185
      %p192 = scmp.eq.s32.totalorder %s19, 1
      %p193 = por %p191, %p192
      %p194 = scmp.ne.s32.totalorder %s186, %s189
      %p195 = scmp.eq.s32.totalorder %s19, 0
      %p196 = por %p194, %p195
      %p197 = scmp.ne.s32.totalorder %s186, %s189
      %p198 = scmp.eq.s32.totalorder %s24, 1
      %p199 = por %p197, %p198
      %p200 = scmp.ne.s32.totalorder %s189, %s190
      %p201 = scmp.eq.s32.totalorder %s24, 0
      %p202 = por %p200, %p201
      %p203 = scmp.ne.s32.totalorder %s189, %s190
      %p204 = scmp.eq.s32.totalorder %s25, 1
      %p205 = por %p203, %p204
      %p207 = scmp.ne.s32.totalorder %s190, %s206
      %p208 = scmp.eq.s32.totalorder %s25, 0
      %p209 = por %p207, %p208
      %p210 = scmp.le.s32.totalorder 1, %s19
      %p211 = scmp.lt.s32.totalorder %s19, 3
      %p212 = pnand %p210, %p211
      %p213 = pneg %p212
      // Predicated region
      $region9: #{tpu_custom_call.1} parent=5 // pred_check
        _
      $region10: #{tpu_custom_call.1} parent=5 // pred_check_branch
        %215 = sbr.rel (%p212) target = $region12
      $region11: #{tpu_custom_call.1} parent=5 // pred_region
        %s216 = ssub.s32 %s19, 1
      $region12: #{tpu_custom_call.1} parent=5 // pred_fallthru
        _
      %p217 = scmp.lt.s32.totalorder %s19, 2
      // Predicated region
      $region13: #{tpu_custom_call.1} parent=5 // pred_check
        %p218 = pneg %p217
      $region14: #{tpu_custom_call.1} parent=5 // pred_check_branch
        %220 = sbr.rel (%p218) target = $region16
      $region15: #{tpu_custom_call.1} parent=5 // pred_region
        // Predicated region
        $region17: #{tpu_custom_call.1} parent=15 // pred_check
          %p221 = pneg %p66
        $region18: #{tpu_custom_call.1} parent=15 // pred_check_branch
          %223 = sbr.rel (%p221) target = $region20
        $region19: #{tpu_custom_call.1} parent=15 // pred_region
          %s224 = sand.u32 %s56, 1
          %s225 = scalar_lea.sflag [#allocation6], %s224
          %s226 = sand.u32 %s56, 1
          %s227 = smul.addr %s226, 8
          %s228 = scalar_lea.vmem [#allocation5], %s227
          %s229 = sadd.s32 %s27, %s28
          %p230 = scmp.lt.s32.totalorder %s229, 0
          %s231 = scalar_select %p230, %s229, 0
          %233 = vsyncadd %s225, 0
          %s234 = smul.addr %s26, 4
          %s235 = sadd.s32 %s231, %s234
          %s236 = smul.addr %s235, 2
          %s237 = scalar_lea.hbm %s0, %s236
          %s238 = sshll.u32 %s237, 4
          %s239 = int_to_ptr.hbm [resolvable:$true] %s238
          %s240 = sshll.u32 %s228, 4
          %s241 = int_to_ptr.vmem [resolvable:$true] %s240
          %246 = dma.hbm_to_vmem [thread:$0]  %s239, 128, %s241, %s225, 32, 32, 2
        $region20: #{tpu_custom_call.1} parent=15 // pred_fallthru
          _
        // Predicated region
        $region21: #{tpu_custom_call.1} parent=15 // pred_check
          %p247 = pneg %p100
        $region22: #{tpu_custom_call.1} parent=15 // pred_check_branch
          %249 = sbr.rel (%p247) target = $region24
        $region23: #{tpu_custom_call.1} parent=15 // pred_region
          %s250 = sand.u32 %s19, 1
          %s251 = scalar_lea.sflag [#allocation8], %s250
          %s252 = sand.u32 %s90, 1
          %s253 = smul.addr %s252, 8
          %s254 = scalar_lea.vmem [#allocation7], %s253
          %s255 = sadd.s32 %s27, %s28
          %p256 = scmp.lt.s32.totalorder %s255, 0
          %s257 = scalar_select %p256, %s255, 0
          %259 = vsyncadd %s251, 0
          %s260 = smul.addr %s26, 4
          %s261 = sadd.s32 %s257, %s260
          %s262 = smul.addr %s261, 2
          %s263 = scalar_lea.hbm %s1, %s262
          %s264 = sshll.u32 %s263, 4
          %s265 = int_to_ptr.hbm [resolvable:$true] %s264
          %s266 = sshll.u32 %s254, 4
          %s267 = int_to_ptr.vmem [resolvable:$true] %s266
          %272 = dma.hbm_to_vmem [thread:$0]  %s265, 128, %s267, %s251, 32, 32, 2
        $region24: #{tpu_custom_call.1} parent=15 // pred_fallthru
          _
        // Predicated region
        $region25: #{tpu_custom_call.1} parent=15 // pred_check
          %p273 = pneg %p134
        $region26: #{tpu_custom_call.1} parent=15 // pred_check_branch
          %275 = sbr.rel (%p273) target = $region28
        $region27: #{tpu_custom_call.1} parent=15 // pred_region
          %s276 = sand.u32 %s19, 1
          %s277 = scalar_lea.sflag [#allocation8], %s276
          %s278 = sand.u32 %s124, 1
          %s279 = smul.addr %s278, 2
          %s280 = scalar_lea.vmem [#allocation9], %s279
          %s281 = sadd.s32 %s27, %s28
          %p282 = scmp.lt.s32.totalorder %s281, 0
          %s283 = scalar_select %p282, %s281, 0
          %285 = vsyncadd %s277, 0
          %s286 = sadd.s32 %s283, %s26
          %s287 = smul.addr %s286, 2
          %s288 = scalar_lea.hbm %s2, %s287
          %s290 = sshll.u32 %s288, 4
          %s291 = int_to_ptr.hbm [resolvable:$true] %s290
          %s292 = sshll.u32 %s280, 4
          %s293 = int_to_ptr.vmem [resolvable:$true] %s292
          %295 = dma.hbm_to_vmem [thread:$0]  %s291, 32, %s293, %s277
        $region28: #{tpu_custom_call.1} parent=15 // pred_fallthru
          _
        // Predicated region
        $region29: #{tpu_custom_call.1} parent=15 // pred_check
          %p296 = pneg %p168
        $region30: #{tpu_custom_call.1} parent=15 // pred_check_branch
          %298 = sbr.rel (%p296) target = $region32
        $region31: #{tpu_custom_call.1} parent=15 // pred_region
          %s299 = sand.u32 %s158, 1
          %s300 = scalar_lea.sflag [#allocation11], %s299
          %s301 = sand.u32 %s158, 1
          %s302 = smul.addr %s301, 2
          %s303 = scalar_lea.vmem [#allocation10], %s302
          %s304 = sadd.s32 %s27, %s28
          %p305 = scmp.lt.s32.totalorder %s304, 0
          %s306 = scalar_select %p305, %s304, 0
          %308 = vsyncadd %s300, 0
          %s309 = sadd.s32 %s306, %s26
          %s310 = smul.addr %s309, 2
          %s311 = scalar_lea.hbm %s3, %s310
          %s313 = sshll.u32 %s311, 4
          %s314 = int_to_ptr.hbm [resolvable:$true] %s313
          %s315 = sshll.u32 %s303, 4
          %s316 = int_to_ptr.vmem [resolvable:$true] %s315
          %318 = dma.hbm_to_vmem [thread:$0]  %s314, 32, %s316, %s300
        $region32: #{tpu_custom_call.1} parent=15 // pred_fallthru
          _
      $region16: #{tpu_custom_call.1} parent=5 // pred_fallthru
        _
      %p319 = scmp.le.s32.totalorder 1, %s19
      %p320 = scmp.lt.s32.totalorder %s19, 3
      %p321 = pnand %p319, %p320
      %p322 = pneg %p321
      // Predicated region
      $region33: #{tpu_custom_call.1} parent=5 // pred_check
        _
      $region34: #{tpu_custom_call.1} parent=5 // pred_check_branch
        %324 = sbr.rel (%p321) target = $region36
      $region35: #{tpu_custom_call.1} parent=5 // pred_region
        %s325 = ssub.s32 %s19, 1
        %s326 = sand.u32 %s59, 1
        %s327 = scalar_lea.sflag [#allocation6], %s326
        %s328 = sand.u32 %s59, 1
        %s329 = smul.addr %s328, 8
        %s330 = scalar_lea.vmem [#allocation5], %s329
        // Predicated region
        $region37: #{tpu_custom_call.1} parent=35 // pred_check
          %p331 = pneg %p72
        $region38: #{tpu_custom_call.1} parent=35 // pred_check_branch
          %333 = sbr.rel (%p331) target = $region40
        $region39: #{tpu_custom_call.1} parent=35 // pred_region
          %335 = dma.done %s327, 128
        $region40: #{tpu_custom_call.1} parent=35 // pred_fallthru
          _
        %s336 = sand.u32 %s24, 1
        %s337 = scalar_lea.sflag [#allocation8], %s336
        %s338 = sand.u32 %s93, 1
        %s339 = smul.addr %s338, 8
        %s340 = scalar_lea.vmem [#allocation7], %s339
        // Predicated region
        $region41: #{tpu_custom_call.1} parent=35 // pred_check
          %p341 = pneg %p106
        $region42: #{tpu_custom_call.1} parent=35 // pred_check_branch
          %343 = sbr.rel (%p341) target = $region44
        $region43: #{tpu_custom_call.1} parent=35 // pred_region
          %345 = dma.done %s337, 128
        $region44: #{tpu_custom_call.1} parent=35 // pred_fallthru
          _
        %s346 = sand.u32 %s24, 1
        %s347 = scalar_lea.sflag [#allocation8], %s346
        %s348 = sand.u32 %s127, 1
        %s349 = smul.addr %s348, 2
        %s350 = scalar_lea.vmem [#allocation9], %s349
        // Predicated region
        $region45: #{tpu_custom_call.1} parent=35 // pred_check
          %p351 = pneg %p140
        $region46: #{tpu_custom_call.1} parent=35 // pred_check_branch
          %353 = sbr.rel (%p351) target = $region48
        $region47: #{tpu_custom_call.1} parent=35 // pred_region
          %355 = dma.done %s347, 32
        $region48: #{tpu_custom_call.1} parent=35 // pred_fallthru
          _
        %s356 = sand.u32 %s161, 1
        %s357 = scalar_lea.sflag [#allocation11], %s356
        %s358 = sand.u32 %s161, 1
        %s359 = smul.addr %s358, 2
        %s360 = scalar_lea.vmem [#allocation10], %s359
        // Predicated region
        $region49: #{tpu_custom_call.1} parent=35 // pred_check
          %p361 = pneg %p174
        $region50: #{tpu_custom_call.1} parent=35 // pred_check_branch
          %363 = sbr.rel (%p361) target = $region52
        $region51: #{tpu_custom_call.1} parent=35 // pred_region
          %365 = dma.done %s357, 32
        $region52: #{tpu_custom_call.1} parent=35 // pred_fallthru
          _
        %s366 = sand.u32 %s59, 1
        %s367 = scalar_lea.sflag [#allocation6], %s366
        %s368 = sand.u32 %s59, 1
        %s369 = smul.addr %s368, 8
        %s370 = scalar_lea.vmem [#allocation5], %s369
        %p371 = pneg %p72
        %p372 = pneg %p69
        %s373 = sand.u32 %s24, 1
        %s374 = scalar_lea.sflag [#allocation8], %s373
        %s375 = sand.u32 %s93, 1
        %s376 = smul.addr %s375, 8
        %s377 = scalar_lea.vmem [#allocation7], %s376
        %p378 = pneg %p106
        %p379 = pneg %p103
        %s380 = sand.u32 %s24, 1
        %s381 = scalar_lea.sflag [#allocation8], %s380
        %s382 = sand.u32 %s127, 1
        %s383 = smul.addr %s382, 2
        %s384 = scalar_lea.vmem [#allocation9], %s383
        %p385 = pneg %p140
        %p386 = pneg %p137
        %s387 = sand.u32 %s161, 1
        %s388 = scalar_lea.sflag [#allocation11], %s387
        %s389 = sand.u32 %s161, 1
        %s390 = smul.addr %s389, 2
        %s391 = scalar_lea.vmem [#allocation10], %s390
        %p392 = pneg %p174
        %p393 = pneg %p171
        %p394 = pneg %p202
        %p395 = pneg %p199
        %p396 = scmp.lt.s32.totalorder %s29, 1
        %s397 = scalar_select %p396, %s29, 1
        %p398 = scmp.lt.s32.totalorder %s30, 0
        %s399 = scalar_select %p398, %s30, 0
        %s400 = sadd.s32 %s399, %s397
        %s401 = smul.addr %s400, 4
        %s402 = scalar_lea.vmem %s4, %s401
        %s403 = sadd.s32 %s30, %s31
        %p404 = scmp.lt.s32.totalorder %s403, 0
        %s405 = scalar_select %p404, %s403, 0
        %s406 = sadd.s32 %s30, %s31
        %p407 = scmp.lt.s32.totalorder %s406, 0
        %s408 = scalar_select %p407, %s406, 0
        %s409 = sadd.s32 %s30, %s31
        %p410 = scmp.lt.s32.totalorder %s409, 0
        %s411 = scalar_select %p410, %s409, 0
        %s412 = sadd.s32 %s30, %s31
        %p413 = scmp.lt.s32.totalorder %s412, 0
        %s414 = scalar_select %p413, %s412, 0
        %p415 = scmp.lt.s32.totalorder %s29, 1
        %s416 = scalar_select %p415, %s29, 1
        %p417 = scmp.lt.s32.totalorder %s30, 0
        %s418 = scalar_select %p417, %s30, 0
        %s419 = sadd.s32 %s418, %s416
        %s420 = smul.addr %s419, 4
        %s421 = scalar_lea.vmem %s4, %s420
        %p422 = scmp.eq.s32.totalorder %s31, 0
        // Predicated region
        $region53: #{tpu_custom_call.1} parent=35 // pred_check
          %p423 = pneg %p422
        $region54: #{tpu_custom_call.1} parent=35 // pred_check_branch
          %425 = sbr.rel (%p423) target = $region56
        $region55: #{tpu_custom_call.1} parent=35 // pred_region
          %426 = vst [vmem:[#allocation2] sm:$0x3] 0.0
          %427 = vst [vmem:[#allocation3] sm:$0x3] 0.0
          %428 = vst [vmem:[#allocation4] sm:$0x3] 0.0
        $region56: #{tpu_custom_call.1} parent=35 // pred_fallthru
          _
        %v429 = vld [vmem:[%s330] sm:$0x3]
        %v430 = vld [vmem:[%s330 + $0x2] sm:$0x3]
        %v431 = vld [vmem:[%s330 + $0x4] sm:$0x3]
        %v432 = vld [vmem:[%s330 + $0x6] sm:$0x3]
        %v433 = vld [vmem:[%s340] sm:$0x3]
        %v434 = vld [vmem:[%s340 + $0x2] sm:$0x3]
        %v435 = vld [vmem:[%s340 + $0x4] sm:$0x3]
        %v436 = vld [vmem:[%s340 + $0x6] sm:$0x3]
        %v437 = vld [vmem:[%s350] sm:$0x3]
        %v438 = vld [vmem:[%s360] sm:$0x3]
        %v439 = vmax.f32 %v438, 1e-06
        %v440 = vsub.f32 %v429, %v433
        %v441 = vsub.f32 %v430, %v434
        %v442 = vsub.f32 %v431, %v435
        %v443 = vsub.f32 %v432, %v436
        %v444 = vadd.f32 %v440, 1e-06
        %v445 = vadd.f32 %v441, 1e-06
        %v446 = vadd.f32 %v442, 1e-06
        %v447 = vadd.f32 %v443, 1e-06
        %v448 = vmul.f32 %v444, %v444
        %v449 = vmul.f32 %v445, %v445
        %v450 = vmul.f32 %v446, %v446
        %v451 = vmul.f32 %v447, %v447
        %vm452 = vcmask 1041408
        %v453 = vsel %vm452, %v448, 0.0
        %v454 = vsel %vm452, %v449, 0.0
        %v455 = vadd.f32 %v453, %v454
        %v456 = vsel %vm452, %v450, 0.0
        %v457 = vadd.f32 %v455, %v456
        %v458 = vsel %vm452, %v451, 0.0
        %v459 = vadd.f32 %v457, %v458
        %v460 = vrsqrt.pop %v459
        %v461 = vmul.f32 %v460, %v459
        %v462 = vmul.f32 %v461, %v460
        %v463 = vmul.f32 0.5, %v462
        %v464 = vsub.f32 1.5, %v463
        %v465 = vmul.f32 %v460, %v464
        %v466 = vmul.f32 %v459, %v465
        %vm467 = vcmp.eq.f32.partialorder %v459, inf
        %v468 = vsel %vm467, %v459, %v466
        %vm469 = vcmp.eq.f32.partialorder %v459, 0.0
        %v470 = vand.u32 %v459, 2147483648
        %v471 = vsel %vm469, %v470, %v468
        %v472 = vlog2.pop %v439
        %v473 = vmul.f32 %v472, 0.6931472
        %v474 = vmul.f32 %v473, 3.0
        %v475 = vmul.f32 %v439, 2.0
        %v476 = vmul.f32 %v475, %v439
        %v477 = vrcp.pop %v476
        %v478 = vmul.f32 %v476, %v477
        %v479 = vsub.f32 1.0, %v478
        %v480 = vmul.f32 %v477, %v479
        %v481 = vadd.f32 %v477, %v480
        %vm482 = vweird.f32 %v476
        %vm483 = vweird.f32 %v477
        %vm484 = vmor %vm482, %vm483
        %v485 = vsel %vm484, %v477, %v481
        %v486 = vand.u32 2147483647, %v476
        %vm487 = vcmp.eq.f32.partialorder %v486, 8.507059e+37
        %v488 = vand.u32 %v476, 2147483648
        %v489 = vor.u32 1.1754944e-38, %v488
        %v490 = vsel %vm487, %v489, %v485
        %v491 = vmul.f32 %v471, %v490
        %v492 = vadd.f32 %v474, %v491
        %v493 = vmul.f32 %v492, %v437
        %v494 = vmul.f32 %v437, %v471
        %vm495 = vcmp.gt.f32.partialorder %v494, 0.05
        %v496 = vld [vmem:[#allocation2] sm:$0x3]
        %v497 = vadd.f32 %v496, %v493
        %498 = vst [vmem:[#allocation2] sm:$0x3] %v497
        %v499 = vld [vmem:[#allocation3] sm:$0x3]
        %v500 = vadd.f32 %v499, %v437
        %501 = vst [vmem:[#allocation3] sm:$0x3] %v500
        %v502 = vld [vmem:[#allocation4] sm:$0x3]
        %v503 = vsel %vm495, 1, 0
        %v504 = vcvt.s32.f32 %v503
        %v505 = vadd.f32 %v502, %v504
        %506 = vst [vmem:[#allocation4] sm:$0x3] %v505
        // Predicated region
        $region57: #{tpu_custom_call.1} parent=35 // pred_check
          %p507 = pneg %p422
        $region58: #{tpu_custom_call.1} parent=35 // pred_check_branch
          %509 = sbr.rel (%p507) target = $region60
        $region59: #{tpu_custom_call.1} parent=35 // pred_region
          %v510 = vld [vmem:[#allocation2] sm:$0x3]
          %v511 = vsel %vm452, %v510, 0.0
          %v512 = vrot.slane %v511, 4
          %v513 = vadd.f32 %v511, %v512
          %v514 = vrot.slane %v513, 2
          %v515 = vadd.f32 %v513, %v514
          %v516 = vrot.slane %v515, 1
          %v517 = vadd.f32 %v515, %v516
          %518 = vst [vmem:[%s421] sm:$0x1] %v517
          %v519 = vld [vmem:[#allocation3] sm:$0x3]
          %v520 = vsel %vm452, %v519, 0.0
          %v521 = vrot.slane %v520, 4
          %v522 = vadd.f32 %v520, %v521
          %v523 = vrot.slane %v522, 2
          %v524 = vadd.f32 %v522, %v523
          %v525 = vrot.slane %v524, 1
          %v526 = vadd.f32 %v524, %v525
          %527 = vst [vmem:[%s421 + $0x1] sm:$0x1] %v526
          %v528 = vld [vmem:[#allocation4] sm:$0x3]
          %v529 = vsel %vm452, %v528, 0.0
          %v530 = vrot.slane %v529, 4
          %v531 = vadd.f32 %v529, %v530
          %v532 = vrot.slane %v531, 2
          %v533 = vadd.f32 %v531, %v532
          %v534 = vrot.slane %v533, 1
          %v535 = vadd.f32 %v533, %v534
          %536 = vst [vmem:[%s421 + $0x2] sm:$0x1] %v535
        $region60: #{tpu_custom_call.1} parent=35 // pred_fallthru
          _
        %p537 = scmp.lt.s32.totalorder %s29, 1
        %s538 = scalar_select %p537, %s29, 1
        %p539 = scmp.lt.s32.totalorder %s30, 0
        %s540 = scalar_select %p539, %s30, 0
        %s541 = sadd.s32 %s540, %s538
        %s542 = smul.addr %s541, 4
        %s543 = scalar_lea.vmem %s4, %s542
        // Predicated region
        $region61: #{tpu_custom_call.1} parent=35 // pred_check
          %p544 = pneg %p199
        $region62: #{tpu_custom_call.1} parent=35 // pred_check_branch
          %546 = sbr.rel (%p544) target = $region64
        $region63: #{tpu_custom_call.1} parent=35 // pred_region
          _
        $region64: #{tpu_custom_call.1} parent=35 // pred_fallthru
          _
      $region36: #{tpu_custom_call.1} parent=5 // pred_fallthru
        _
      %p547 = scmp.le.s32.totalorder 2, %s19
      // Predicated region
      $region65: #{tpu_custom_call.1} parent=5 // pred_check
        %p548 = pneg %p547
      $region66: #{tpu_custom_call.1} parent=5 // pred_check_branch
        %550 = sbr.rel (%p548) target = $region68
      $region67: #{tpu_custom_call.1} parent=5 // pred_region
        %s551 = ssub.s32 %s19, 2
        // Predicated region
        $region69: #{tpu_custom_call.1} parent=67 // pred_check
          %p552 = pneg %p205
        $region70: #{tpu_custom_call.1} parent=67 // pred_check_branch
          %554 = sbr.rel (%p552) target = $region72
        $region71: #{tpu_custom_call.1} parent=67 // pred_region
          %p555 = scmp.lt.s32.totalorder %s32, 1
          %s556 = scalar_select %p555, %s32, 1
          %p557 = scmp.lt.s32.totalorder %s33, 0
          %s558 = scalar_select %p557, %s33, 0
          %s559 = sadd.s32 %s558, %s556
          %s560 = smul.addr %s559, 4
          %s561 = scalar_lea.vmem %s4, %s560
        $region72: #{tpu_custom_call.1} parent=67 // pred_fallthru
          _
      $region68: #{tpu_custom_call.1} parent=5 // pred_fallthru
        _
    $region6: #{tpu_custom_call.1} parent=1 // loop_footer
      %s23 = sadd.s32 1, %s19
    $region7: #{tpu_custom_call.1} parent=1 // loop_footer_branch
      %18 = sbr.rel target = $region3
    $region8: #{tpu_custom_call.1} parent=1 // loop_exit
      _
    %562 = vsyncpa [#allocation6], 1
    %s563 = scalar_lea.sflag [#allocation6], 1
    %564 = vsyncpa %s563, 1
    %565 = vsyncpa [#allocation8], 1
    %s566 = scalar_lea.sflag [#allocation8], 1
    %567 = vsyncpa %s566, 1
    %568 = vsyncpa [#allocation11], 1
    %s569 = scalar_lea.sflag [#allocation11], 1
    %570 = vsyncpa %s569, 1

</llo_original>
